<compile_context>
chip_gen: v7x
topology: tpu7x:2x2x1
jax: 0.10.0
libtpu: 0.0.40
codegen_flags: <defaults>
</compile_context>

<pallas_src>
import functools

import jax
import jax.numpy as jnp
from jax import lax
from jax.experimental import pallas as pl
from jax.experimental.pallas import tpu as pltpu

EPS = 1e-5                 # nn.BatchNorm2d / cppcuda_bn default epsilon
_SLAB_BUDGET = 2 << 20     # target bytes for one (N, cb, H*W) channel slab


# ---------------------------------------------------------------------------
# Pallas kernel: training-mode BatchNorm2d (+ fused conv-bias and ReLU)
# ---------------------------------------------------------------------------
def _bn_group_kernel(x_ref, gamma_ref, beta_ref, bias_ref, o_ref, *,
                     inv_count, eps, fuse_relu):
    """One channel group per grid step.

    x_ref / o_ref : (N, cb, H*W)  -- resident slab for this channel group
    gamma_ref     : (cb, 1)
    beta_ref      : (cb, 1)
    bias_ref      : (cb, 1)       -- fused conv bias (zeros if unused)
    """
    x = x_ref[...].astype(jnp.float32)                       # (N, cb, HW)
    x = x + bias_ref[...].astype(jnp.float32)                # fused conv bias

    # Per-channel statistics, centered two-moment form.
    # Batch-axis reduce = plain VPU vreg adds; one cross-lane (XLU) reduce per
    # channel group produces the (cb, 1) moments.
    per_lane_sum = jnp.sum(x, axis=0)                        # (cb, HW)
    mean = jnp.sum(per_lane_sum, axis=-1, keepdims=True) * inv_count   # (cb, 1)

    centered = x - mean                                      # bcast (cb, 1)
    per_lane_sq = jnp.sum(centered * centered, axis=0)       # (cb, HW)
    var = jnp.sum(per_lane_sq, axis=-1, keepdims=True) * inv_count     # (cb, 1)

    inv_std = lax.rsqrt(var + eps)                           # EUP slot
    scale = gamma_ref[...].astype(jnp.float32) * inv_std     # (cb, 1)
    shift = beta_ref[...].astype(jnp.float32) - mean * scale # (cb, 1)

    # Normalize: 2 VPU ops per element (fused affine), optional fused ReLU.
    y = x * scale + shift
    if fuse_relu:
        y = jnp.maximum(y, 0.0)
    o_ref[...] = y.astype(o_ref.dtype)


def _pick_channel_block(c_padded, per_channel_bytes):
    """Largest multiple-of-8 divisor of c_padded whose slab fits the budget."""
    for cand in range(c_padded, 0, -8):
        if c_padded % cand == 0 and cand * per_channel_bytes <= _SLAB_BUDGET:
            return cand
    return 8


def batchnorm2d_parallel(x_nchw, gamma, beta, bias=None, *, eps=EPS,
                         fuse_relu=False):
    """Training-mode BatchNorm2d forward over an NCHW input (batch stats)."""
    N, C, H, W = x_nchw.shape
    HW = H * W
    itemsize = jnp.dtype(x_nchw.dtype).itemsize

    Cp = ((C + 7) // 8) * 8                    # pad channels to sublane (8)
    cb = _pick_channel_block(Cp, N * HW * itemsize)
    n_groups = Cp // cb
    c_pad = Cp - C

    # Free layout change (collapse trailing dims) -- no HBM transpose.
    x3 = x_nchw.reshape(N, C, HW)
    gamma = gamma.astype(jnp.float32)
    beta = beta.astype(jnp.float32)
    bias = (jnp.zeros((C,), jnp.float32) if bias is None
            else bias.astype(jnp.float32))
    if c_pad:
        x3 = jnp.pad(x3, ((0, 0), (0, c_pad), (0, 0)))
        gamma = jnp.pad(gamma, (0, c_pad), constant_values=1.0)
        beta = jnp.pad(beta, (0, c_pad))
        bias = jnp.pad(bias, (0, c_pad))
    gamma2 = gamma.reshape(Cp, 1)
    beta2 = beta.reshape(Cp, 1)
    bias2 = bias.reshape(Cp, 1)

    inv_count = 1.0 / float(N * HW)

    # Per-step VMEM footprint: double-buffered in/out slabs + f32 temporaries.
    slab_bytes = N * cb * HW * itemsize
    vmem_limit = int(min(max(10 * slab_bytes + (2 << 20), 32 << 20), 48 << 20))
    # TODO(synk): for very large N*H*W (channel-group slab beyond the VMEM
    # budget even at cb=8) switch to a two-pass spatially-tiled stats+apply
    # pipeline.

    kernel = functools.partial(_bn_group_kernel, inv_count=inv_count, eps=eps,
                               fuse_relu=fuse_relu)

    out3 = pl.pallas_call(
        kernel,
        out_shape=jax.ShapeDtypeStruct((N, Cp, HW), x_nchw.dtype),
        grid_spec=pltpu.PrefetchScalarGridSpec(
            num_scalar_prefetch=0,
            grid=(n_groups,),
            in_specs=[
                pl.BlockSpec((N, cb, HW), lambda g: (0, g, 0)),
                pl.BlockSpec((cb, 1), lambda g: (g, 0)),
                pl.BlockSpec((cb, 1), lambda g: (g, 0)),
                pl.BlockSpec((cb, 1), lambda g: (g, 0)),
            ],
            out_specs=pl.BlockSpec((N, cb, HW), lambda g: (0, g, 0)),
        ),
        compiler_params=pltpu.CompilerParams(
            dimension_semantics=("parallel",),   # split groups over 2 TCs (v7x)
            vmem_limit_bytes=vmem_limit,
        ),
    )(x3, gamma2, beta2, bias2)

    if c_pad:
        out3 = out3[:, :C, :]
    return out3.reshape(N, C, H, W)


# ---------------------------------------------------------------------------
# Rest of Conv_Parallel (plain XLA ops around the Pallas BN kernel)
# ---------------------------------------------------------------------------
def _max_pool_2x2(x):
    # TODO(synk): 2x2 max-pool could be fused into the BN kernel's epilogue to
    # save another HBM round trip; kept as an XLA reduce_window for robustness.
    return lax.reduce_window(x, -jnp.inf, lax.max,
                             window_dimensions=(1, 1, 2, 2),
                             window_strides=(1, 1, 2, 2),
                             padding="VALID")


# TODO(synk): conv2d / max_pool2d / linear use XLA ops (lax.conv_general_dilated,
# lax.reduce_window, jnp.dot); only the custom CUDA op (BatchNormParallel2d) is
# a Pallas kernel (with the conv bias and ReLU fused into it).
def conv_parallel_forward(params, x):
    dn = ("NCHW", "OIHW", "NCHW")
    x = lax.conv_general_dilated(x, params["conv1_w"], (1, 1), "SAME",
                                 dimension_numbers=dn)
    x = batchnorm2d_parallel(x, params["bn1_gamma"], params["bn1_beta"],
                             bias=params["conv1_b"],
                             fuse_relu=True)           # F.relu(bn1(conv1(x)))
    x = _max_pool_2x2(x)
    x = lax.conv_general_dilated(x, params["conv2_w"], (1, 1), "SAME",
                                 dimension_numbers=dn)
    x = batchnorm2d_parallel(x, params["bn2_gamma"], params["bn2_beta"],
                             bias=params["conv2_b"],
                             fuse_relu=True)           # F.relu(bn2(conv2(x)))
    x = _max_pool_2x2(x)
    x = x.reshape(x.shape[0], -1)                      # (N, 64*7*7)
    x = jnp.maximum(x @ params["fc1_w"] + params["fc1_b"], 0.0)
    return x @ params["fc2_w"] + params["fc2_b"]


def init_params(key):
    k1, k2, k3, k4, k5, k6 = jax.random.split(key, 6)
    return {
        "conv1_w": 0.10 * jax.random.normal(k1, (32, 1, 3, 3), jnp.float32),
        "conv1_b": 0.05 * jax.random.normal(k5, (32,), jnp.float32),
        "bn1_gamma": jnp.ones((32,), jnp.float32),
        "bn1_beta": jnp.zeros((32,), jnp.float32),
        "conv2_w": 0.05 * jax.random.normal(k2, (64, 32, 3, 3), jnp.float32),
        "conv2_b": 0.05 * jax.random.normal(k6, (64,), jnp.float32),
        "bn2_gamma": jnp.ones((64,), jnp.float32),
        "bn2_beta": jnp.zeros((64,), jnp.float32),
        "fc1_w": 0.02 * jax.random.normal(k3, (64 * 7 * 7, 128), jnp.float32),
        "fc1_b": jnp.zeros((128,), jnp.float32),
        "fc2_w": 0.10 * jax.random.normal(k4, (128, 10), jnp.float32),
        "fc2_b": jnp.zeros((10,), jnp.float32),
    }


if __name__ == "__main__":
    key = jax.random.PRNGKey(0)
    k_x, k_g1, k_b1, k_g2, k_b2, k_c, k_p = jax.random.split(key, 7)

    # --- 1) standalone check of the Pallas BN kernel at the module's shapes --
    def bn_ref(x, gamma, beta, bias, relu):
        c = x.shape[1]
        xb = x + bias.reshape(1, c, 1, 1)
        m = jnp.mean(xb, axis=(0, 2, 3), keepdims=True)
        v = jnp.mean((xb - m) ** 2, axis=(0, 2, 3), keepdims=True)
        y = (gamma.reshape(1, c, 1, 1) * (xb - m) * lax.rsqrt(v + EPS)
             + beta.reshape(1, c, 1, 1))
        return jnp.maximum(y, 0.0) if relu else y

    for shape, kg, kb in [((2, 32, 28, 28), k_g1, k_b1),
                          ((2, 64, 14, 14), k_g2, k_b2)]:
        c = shape[1]
        x = jax.random.normal(k_x, shape, dtype=jnp.float32)
        gamma = 1.0 + 0.1 * jax.random.normal(kg, (c,), dtype=jnp.float32)
        beta = 0.1 * jax.random.normal(kb, (c,), dtype=jnp.float32)
        bias = 0.1 * jax.random.normal(k_c, (c,), dtype=jnp.float32)
        for use_bias in (None, bias):
            for relu in (False, True):
                out = jax.block_until_ready(
                    batchnorm2d_parallel(x, gamma, beta, bias=use_bias,
                                         fuse_relu=relu))
                b_ref = jnp.zeros((c,), jnp.float32) if use_bias is None else bias
                ref = bn_ref(x, gamma, beta, b_ref, relu)
                err = float(jnp.max(jnp.abs(out - ref)))
                assert out.shape == shape and err < 2e-4, (shape, relu, err)

    # --- 2) full Conv_Parallel forward: batch=2, 1x28x28 input -> 10 logits --
    params = init_params(k_p)
    img = jax.random.normal(k_x, (2, 1, 28, 28), dtype=jnp.float32)
    logits = jax.block_until_ready(jax.jit(conv_parallel_forward)(params, img))
    assert logits.shape == (2, 10)
    assert bool(jnp.all(jnp.isfinite(logits)))

    print("KERNEL_OK")
</pallas_src>

<mosaic_0001>
module attributes {stable_mosaic.version = 11 : i64} {
  func.func @_bn_group_kernel(%arg0: i32, %arg1: memref<2x32x784xf32, #tpu.memory_space<vmem>>, %arg2: memref<32x1xf32, #tpu.memory_space<vmem>>, %arg3: memref<32x1xf32, #tpu.memory_space<vmem>>, %arg4: memref<32x1xf32, #tpu.memory_space<vmem>>, %arg5: memref<2x32x784xf32, #tpu.memory_space<vmem>>) attributes {dimension_semantics = [#tpu.dimension_semantics<parallel>], iteration_bounds = array<i64: 1>, scalar_prefetch = 0 : i64, scratch_operands = 0 : i64, tpu.core_type = #tpu.core_type<tc>, window_params = [{transform_indices = @transform_0, window_bounds = array<i64: 2, 32, 784>}, {transform_indices = @transform_1, window_bounds = array<i64: 32, 1>}, {transform_indices = @transform_2, window_bounds = array<i64: 32, 1>}, {transform_indices = @transform_3, window_bounds = array<i64: 32, 1>}, {transform_indices = @transform_4, window_bounds = array<i64: 2, 32, 784>}]} {
    %c0 = arith.constant 0 : index
    %c0_0 = arith.constant 0 : index
    %c0_1 = arith.constant 0 : index
    %0 = vector.load %arg1[%c0, %c0_0, %c0_1] : memref<2x32x784xf32, #tpu.memory_space<vmem>>, vector<2x32x784xf32>
    %c0_2 = arith.constant 0 : index
    %c0_3 = arith.constant 0 : index
    %1 = vector.load %arg4[%c0_2, %c0_3] : memref<32x1xf32, #tpu.memory_space<vmem>>, vector<32x1xf32>
    %2 = vector.shape_cast %1 : vector<32x1xf32> to vector<1x32x1xf32>
    %3 = vector.broadcast %2 : vector<1x32x1xf32> to vector<2x32x784xf32>
    %4 = arith.addf %0, %3 : vector<2x32x784xf32>
    %cst = arith.constant dense<0.000000e+00> : vector<32x784xf32>
    %5 = vector.multi_reduction <add>, %4, %cst [0] : vector<2x32x784xf32> to vector<32x784xf32>
    %cst_4 = arith.constant dense<0.000000e+00> : vector<32xf32>
    %6 = vector.multi_reduction <add>, %5, %cst_4 [1] : vector<32x784xf32> to vector<32xf32>
    %7 = vector.shape_cast %6 : vector<32xf32> to vector<32x1xf32>
    %cst_5 = arith.constant 6.37755089E-4 : f32
    %8 = vector.broadcast %cst_5 : f32 to vector<32x1xf32>
    %9 = arith.mulf %7, %8 : vector<32x1xf32>
    %10 = vector.shape_cast %9 : vector<32x1xf32> to vector<1x32x1xf32>
    %11 = vector.broadcast %10 : vector<1x32x1xf32> to vector<2x32x784xf32>
    %12 = arith.subf %4, %11 : vector<2x32x784xf32>
    %13 = arith.mulf %12, %12 : vector<2x32x784xf32>
    %cst_6 = arith.constant dense<0.000000e+00> : vector<32x784xf32>
    %14 = vector.multi_reduction <add>, %13, %cst_6 [0] : vector<2x32x784xf32> to vector<32x784xf32>
    %cst_7 = arith.constant dense<0.000000e+00> : vector<32xf32>
    %15 = vector.multi_reduction <add>, %14, %cst_7 [1] : vector<32x784xf32> to vector<32xf32>
    %16 = vector.shape_cast %15 : vector<32xf32> to vector<32x1xf32>
    %cst_8 = arith.constant 6.37755089E-4 : f32
    %17 = vector.broadcast %cst_8 : f32 to vector<32x1xf32>
    %18 = arith.mulf %16, %17 : vector<32x1xf32>
    %cst_9 = arith.constant 9.99999974E-6 : f32
    %19 = vector.broadcast %cst_9 : f32 to vector<32x1xf32>
    %20 = arith.addf %18, %19 : vector<32x1xf32>
    %21 = math.rsqrt %20 : vector<32x1xf32>
    %c0_10 = arith.constant 0 : index
    %c0_11 = arith.constant 0 : index
    %22 = vector.load %arg2[%c0_10, %c0_11] : memref<32x1xf32, #tpu.memory_space<vmem>>, vector<32x1xf32>
    %23 = arith.mulf %22, %21 : vector<32x1xf32>
    %c0_12 = arith.constant 0 : index
    %c0_13 = arith.constant 0 : index
    %24 = vector.load %arg3[%c0_12, %c0_13] : memref<32x1xf32, #tpu.memory_space<vmem>>, vector<32x1xf32>
    %25 = arith.mulf %9, %23 : vector<32x1xf32>
    %26 = arith.subf %24, %25 : vector<32x1xf32>
    %27 = vector.shape_cast %23 : vector<32x1xf32> to vector<1x32x1xf32>
    %28 = vector.broadcast %27 : vector<1x32x1xf32> to vector<2x32x784xf32>
    %29 = arith.mulf %4, %28 : vector<2x32x784xf32>
    %30 = vector.shape_cast %26 : vector<32x1xf32> to vector<1x32x1xf32>
    %31 = vector.broadcast %30 : vector<1x32x1xf32> to vector<2x32x784xf32>
    %32 = arith.addf %29, %31 : vector<2x32x784xf32>
    %c0_14 = arith.constant 0 : index
    %c0_15 = arith.constant 0 : index
    %c0_16 = arith.constant 0 : index
    %33 = vector.load %arg5[%c0_14, %c0_15, %c0_16] : memref<2x32x784xf32, #tpu.memory_space<vmem>>, vector<2x32x784xf32>
    tpu.vector_store %arg5[%c0_14, %c0_15, %c0_16], %32 {strides = array<i32>} : memref<2x32x784xf32, #tpu.memory_space<vmem>>, vector<2x32x784xf32>,
    return
  }
  func.func @transform_0(%arg0: i32) -> (i32, i32, i32) {
    %c0_i32 = arith.constant 0 : i32
    %c0_i32_0 = arith.constant 0 : i32
    %c0_i32_1 = arith.constant 0 : i32
    return %c0_i32, %arg0, %c0_i32_0 : i32, i32, i32
  }
  func.func @transform_1(%arg0: i32) -> (i32, i32) {
    %c0_i32 = arith.constant 0 : i32
    %c0_i32_0 = arith.constant 0 : i32
    return %arg0, %c0_i32 : i32, i32
  }
  func.func @transform_2(%arg0: i32) -> (i32, i32) {
    %c0_i32 = arith.constant 0 : i32
    %c0_i32_0 = arith.constant 0 : i32
    return %arg0, %c0_i32 : i32, i32
  }
  func.func @transform_3(%arg0: i32) -> (i32, i32) {
    %c0_i32 = arith.constant 0 : i32
    %c0_i32_0 = arith.constant 0 : i32
    return %arg0, %c0_i32 : i32, i32
  }
  func.func @transform_4(%arg0: i32) -> (i32, i32, i32) {
    %c0_i32 = arith.constant 0 : i32
    %c0_i32_0 = arith.constant 0 : i32
    %c0_i32_1 = arith.constant 0 : i32
    return %c0_i32, %arg0, %c0_i32_0 : i32, i32, i32
  }
}

</mosaic_0001>

<llo_original>
// kernel: tpu_custom_call.1
$region0: #{tpu_custom_call.1}
  #allocation0 [shape = 'u32[]', space=smem, size = 0x4, offset = 0x4, fixed_abs, tag = 'smem constant byte address 0x4 - core index']
  #allocation1 [shape = 'u32[144,128]{1,0:T(1,128)}', space=vmem, size = 0x12000, scoped, tag = 'internal scratch']
  %s0 = inlined_call_operand.hbm [shape: f32[2,32,784], index: 0, kind: input, shape index: {}]
  %s1 = inlined_call_operand.vmem [shape: f32[32,1], index: 1, kind: input, shape index: {}]
  %s2 = inlined_call_operand.vmem [shape: f32[32,1], index: 2, kind: input, shape index: {}]
  %s3 = inlined_call_operand.vmem [shape: f32[32,1], index: 3, kind: input, shape index: {}]
  %s4 = inlined_call_operand.hbm [shape: f32[2,32,784], index: 4, kind: output, shape index: {}]
  %s5 = sld [smem:[#allocation0]]
  $region30: #{tpu_custom_call.1} parent=0
    _
  %s7 = ssub.s32 1, %s5
  %s8 = scalar_select 0, %s7, %s5
  $region1: #{tpu_custom_call.1} parent=0
    #allocation2 [shape = 'u8[229376]{0}', space=vmem, size = 0x38000, scoped, tag = 'input window, operand 0, single buffered']
    #allocation3 [shape = 's32[1]{0}', space=sflag, size = 0x4, scoped, tag = 'scoped memory for tpu_custom_call.1']
    #allocation4 [shape = 's32[1]{0}', space=sflag, size = 0x4, scoped, tag = 'scoped memory for tpu_custom_call.1']
    #allocation5 [shape = 'u8[229376]{0}', space=vmem, size = 0x38000, scoped, tag = 'output window, operand 0, single buffered']
    %9 = vsyncpa [#allocation3], 0
    %10 = vsyncpa [#allocation4], 0
    // Predicated region
    $region2: #{tpu_custom_call.1} parent=1 // pred_check
      _
    $region3: #{tpu_custom_call.1} parent=1 // pred_check_branch
      %12 = sbr.rel (0) target = $region5
    $region4: #{tpu_custom_call.1} parent=1 // pred_region
      %s14 = ssub.s32 7168, 7168
      %15 = vsyncadd [#allocation3], %s14
      %s16 = sshll.u32 [#allocation2], 4
      %s17 = int_to_ptr.vmem [resolvable:$true] %s16
      %22 = dma.hbm_to_vmem [thread:$0]  %s0, 7168, %s17, [#allocation3], 896, 896, 56
    $region5: #{tpu_custom_call.1} parent=1 // pred_fallthru
      _
    // Predicated region
    $region6: #{tpu_custom_call.1} parent=1 // pred_check
      _
    $region7: #{tpu_custom_call.1} parent=1 // pred_check_branch
      %24 = sbr.rel (0) target = $region9
    $region8: #{tpu_custom_call.1} parent=1 // pred_region
      _
    $region9: #{tpu_custom_call.1} parent=1 // pred_fallthru
      _
    // Predicated region
    $region10: #{tpu_custom_call.1} parent=1 // pred_check
      _
    $region11: #{tpu_custom_call.1} parent=1 // pred_check_branch
      %26 = sbr.rel (0) target = $region13
    $region12: #{tpu_custom_call.1} parent=1 // pred_region
      _
    $region13: #{tpu_custom_call.1} parent=1 // pred_fallthru
      _
    // Predicated region
    $region14: #{tpu_custom_call.1} parent=1 // pred_check
      _
    $region15: #{tpu_custom_call.1} parent=1 // pred_check_branch
      %28 = sbr.rel (0) target = $region17
    $region16: #{tpu_custom_call.1} parent=1 // pred_region
      _
    $region17: #{tpu_custom_call.1} parent=1 // pred_fallthru
      _
    // Predicated region
    $region18: #{tpu_custom_call.1} parent=1 // pred_check
      _
    $region19: #{tpu_custom_call.1} parent=1 // pred_check_branch
      %30 = sbr.rel (0) target = $region21
    $region20: #{tpu_custom_call.1} parent=1 // pred_region
      %31 = dma.done [#allocation3], 7168
    $region21: #{tpu_custom_call.1} parent=1 // pred_fallthru
      _
    %v32 = vld [vmem:[#allocation2] sm:$0xff]
    %v33 = vld [vmem:[#allocation2 + $0x8] sm:$0xff]
    %v34 = vld [vmem:[#allocation2 + $0x10] sm:$0xff]
    %v35 = vld [vmem:[#allocation2 + $0x18] sm:$0xff]
    %v36 = vld [vmem:[#allocation2 + $0x20] sm:$0xff]
    %v37 = vld [vmem:[#allocation2 + $0x28] sm:$0xff]
    %v38 = vld [vmem:[#allocation2 + $0x30] sm:$0xff]
    %v39 = vld [vmem:[#allocation2 + $0x38] sm:$0xff]
    %v40 = vld [vmem:[#allocation2 + $0x40] sm:$0xff]
    %v41 = vld [vmem:[#allocation2 + $0x48] sm:$0xff]
    %v42 = vld [vmem:[#allocation2 + $0x50] sm:$0xff]
    %v43 = vld [vmem:[#allocation2 + $0x58] sm:$0xff]
    %v44 = vld [vmem:[#allocation2 + $0x60] sm:$0xff]
    %v45 = vld [vmem:[#allocation2 + $0x68] sm:$0xff]
    %v46 = vld [vmem:[#allocation2 + $0x70] sm:$0xff]
    %v47 = vld [vmem:[#allocation2 + $0x78] sm:$0xff]
    %v48 = vld [vmem:[#allocation2 + $0x80] sm:$0xff]
    %v49 = vld [vmem:[#allocation2 + $0x88] sm:$0xff]
    %v50 = vld [vmem:[#allocation2 + $0x90] sm:$0xff]
    %v51 = vld [vmem:[#allocation2 + $0x98] sm:$0xff]
    %v52 = vld [vmem:[#allocation2 + $0xa0] sm:$0xff]
    %v53 = vld [vmem:[#allocation2 + $0xa8] sm:$0xff]
    %v54 = vld [vmem:[#allocation2 + $0xb0] sm:$0xff]
    %v55 = vld [vmem:[#allocation2 + $0xb8] sm:$0xff]
    %v56 = vld [vmem:[#allocation2 + $0xc0] sm:$0xff]
    %v57 = vld [vmem:[#allocation2 + $0xc8] sm:$0xff]
    %v58 = vld [vmem:[#allocation2 + $0xd0] sm:$0xff]
    %v59 = vld [vmem:[#allocation2 + $0xd8] sm:$0xff]
    %v60 = vld [vmem:[#allocation2 + $0xe0] sm:$0xff]
    %v61 = vld [vmem:[#allocation2 + $0xe8] sm:$0xff]
    %v62 = vld [vmem:[#allocation2 + $0xf0] sm:$0xff]
    %v63 = vld [vmem:[#allocation2 + $0xf8] sm:$0xff]
    %v64 = vld [vmem:[#allocation2 + $0x100] sm:$0xff]
    %v65 = vld [vmem:[#allocation2 + $0x108] sm:$0xff]
    %v66 = vld [vmem:[#allocation2 + $0x110] sm:$0xff]
    %v67 = vld [vmem:[#allocation2 + $0x118] sm:$0xff]
    %v68 = vld [vmem:[#allocation2 + $0x120] sm:$0xff]
    %v69 = vld [vmem:[#allocation2 + $0x128] sm:$0xff]
    %v70 = vld [vmem:[#allocation2 + $0x130] sm:$0xff]
    %v71 = vld [vmem:[#allocation2 + $0x138] sm:$0xff]
    %v72 = vld [vmem:[#allocation2 + $0x140] sm:$0xff]
    %v73 = vld [vmem:[#allocation2 + $0x148] sm:$0xff]
    %v74 = vld [vmem:[#allocation2 + $0x150] sm:$0xff]
    %v75 = vld [vmem:[#allocation2 + $0x158] sm:$0xff]
    %v76 = vld [vmem:[#allocation2 + $0x160] sm:$0xff]
    %v77 = vld [vmem:[#allocation2 + $0x168] sm:$0xff]
    %v78 = vld [vmem:[#allocation2 + $0x170] sm:$0xff]
    %v79 = vld [vmem:[#allocation2 + $0x178] sm:$0xff]
    %v80 = vld [vmem:[#allocation2 + $0x180] sm:$0xff]
    %v81 = vld [vmem:[#allocation2 + $0x188] sm:$0xff]
    %v82 = vld [vmem:[#allocation2 + $0x190] sm:$0xff]
    %v83 = vld [vmem:[#allocation2 + $0x198] sm:$0xff]
    %v84 = vld [vmem:[#allocation2 + $0x1a0] sm:$0xff]
    %v85 = vld [vmem:[#allocation2 + $0x1a8] sm:$0xff]
    %v86 = vld [vmem:[#allocation2 + $0x1b0] sm:$0xff]
    %v87 = vld [vmem:[#allocation2 + $0x1b8] sm:$0xff]
    %v88 = vld [vmem:[%s3] sm:$0xff]
    %v89 = vld [vmem:[%s3 + $0x8] sm:$0xff]
    %v90 = vld [vmem:[%s3 + $0x10] sm:$0xff]
    %v91 = vld [vmem:[%s3 + $0x18] sm:$0xff]
    %93 = vset.pattern.permute.xlu0 0
    %94 = vperm.xlu0 %93, %v88
    %v95 = vpop.permute.xlu0 %94
    %98 = vset.pattern.permute.xlu0 0
    %99 = vperm.xlu0 %98, %v89
    %v100 = vpop.permute.xlu0 %99
    %103 = vset.pattern.permute.xlu0 0
    %104 = vperm.xlu0 %103, %v90
    %v105 = vpop.permute.xlu0 %104
    %108 = vset.pattern.permute.xlu0 0
    %109 = vperm.xlu0 %108, %v91
    %v110 = vpop.permute.xlu0 %109
    %v112 = vadd.f32 %v32, %v95
    %v113 = vadd.f32 %v33, %v95
    %v114 = vadd.f32 %v34, %v95
    %v115 = vadd.f32 %v35, %v95
    %v116 = vadd.f32 %v36, %v95
    %v117 = vadd.f32 %v37, %v95
    %v118 = vadd.f32 %v38, %v95
    %v119 = vadd.f32 %v39, %v100
    %v120 = vadd.f32 %v40, %v100
    %v121 = vadd.f32 %v41, %v100
    %v122 = vadd.f32 %v42, %v100
    %v123 = vadd.f32 %v43, %v100
    %v124 = vadd.f32 %v44, %v100
    %v125 = vadd.f32 %v45, %v100
    %v126 = vadd.f32 %v46, %v105
    %v127 = vadd.f32 %v47, %v105
    %v128 = vadd.f32 %v48, %v105
    %v129 = vadd.f32 %v49, %v105
    %v130 = vadd.f32 %v50, %v105
    %v131 = vadd.f32 %v51, %v105
    %v132 = vadd.f32 %v52, %v105
    %v133 = vadd.f32 %v53, %v110
    %v134 = vadd.f32 %v54, %v110
    %v135 = vadd.f32 %v55, %v110
    %v136 = vadd.f32 %v56, %v110
    %v137 = vadd.f32 %v57, %v110
    %v138 = vadd.f32 %v58, %v110
    %v139 = vadd.f32 %v59, %v110
    %v140 = vadd.f32 %v60, %v95
    %v141 = vadd.f32 %v61, %v95
    %v142 = vadd.f32 %v62, %v95
    %v143 = vadd.f32 %v63, %v95
    %v144 = vadd.f32 %v64, %v95
    %v145 = vadd.f32 %v65, %v95
    %v146 = vadd.f32 %v66, %v95
    %v147 = vadd.f32 %v67, %v100
    %v148 = vadd.f32 %v68, %v100
    %v149 = vadd.f32 %v69, %v100
    %v150 = vadd.f32 %v70, %v100
    %v151 = vadd.f32 %v71, %v100
    %v152 = vadd.f32 %v72, %v100
    %v153 = vadd.f32 %v73, %v100
    %v154 = vadd.f32 %v74, %v105
    %v155 = vadd.f32 %v75, %v105
    %v156 = vadd.f32 %v76, %v105
    %v157 = vadd.f32 %v77, %v105
    %v158 = vadd.f32 %v78, %v105
    %v159 = vadd.f32 %v79, %v105
    %v160 = vadd.f32 %v80, %v105
    %v161 = vadd.f32 %v81, %v110
    %v162 = vadd.f32 %v82, %v110
    %v163 = vadd.f32 %v83, %v110
    %v164 = vadd.f32 %v84, %v110
    %v165 = vadd.f32 %v85, %v110
    %v166 = vadd.f32 %v86, %v110
    %v167 = vadd.f32 %v87, %v110
    %v168 = vadd.f32 %v112, %v140
    %v169 = vadd.f32 %v113, %v141
    %v170 = vadd.f32 %v114, %v142
    %v171 = vadd.f32 %v115, %v143
    %v172 = vadd.f32 %v116, %v144
    %v173 = vadd.f32 %v117, %v145
    %vm174 = vcmask 130048
    %v175 = vsel %vm174, %v118, 0.0
    %v176 = vsel %vm174, %v146, 0.0
    %v177 = vadd.f32 %v175, %v176
    %v178 = vadd.f32 %v119, %v147
    %v179 = vadd.f32 %v120, %v148
    %v180 = vadd.f32 %v121, %v149
    %v181 = vadd.f32 %v122, %v150
    %v182 = vadd.f32 %v123, %v151
    %v183 = vadd.f32 %v124, %v152
    %v184 = vsel %vm174, %v125, 0.0
    %v185 = vsel %vm174, %v153, 0.0
    %v186 = vadd.f32 %v184, %v185
    %v187 = vadd.f32 %v126, %v154
    %v188 = vadd.f32 %v127, %v155
    %v189 = vadd.f32 %v128, %v156
    %v190 = vadd.f32 %v129, %v157
    %v191 = vadd.f32 %v130, %v158
    %v192 = vadd.f32 %v131, %v159
    %v193 = vsel %vm174, %v132, 0.0
    %v194 = vsel %vm174, %v160, 0.0
    %v195 = vadd.f32 %v193, %v194
    %v196 = vadd.f32 %v133, %v161
    %v197 = vadd.f32 %v134, %v162
    %v198 = vadd.f32 %v135, %v163
    %v199 = vadd.f32 %v136, %v164
    %v200 = vadd.f32 %v137, %v165
    %v201 = vadd.f32 %v138, %v166
    %v202 = vsel %vm174, %v139, 0.0
    %v203 = vsel %vm174, %v167, 0.0
    %v204 = vadd.f32 %v202, %v203
    %v205 = vadd.f32 %v168, %v169
    %v206 = vadd.f32 %v205, %v170
    %v207 = vadd.f32 %v206, %v171
    %v208 = vadd.f32 %v207, %v172
    %v209 = vadd.f32 %v208, %v173
    %v210 = vsel %vm174, %v177, 0.0
    %v211 = vadd.f32 %v209, %v210
    %212 = vadd.xlane.f32.xlu0 %v211
    %v213 = vpop.xlane.xlu0 %212
    %v214 = vadd.f32 %v178, %v179
    %v215 = vadd.f32 %v214, %v180
    %v216 = vadd.f32 %v215, %v181
    %v217 = vadd.f32 %v216, %v182
    %v218 = vadd.f32 %v217, %v183
    %v219 = vsel %vm174, %v186, 0.0
    %v220 = vadd.f32 %v218, %v219
    %221 = vadd.xlane.f32.xlu0 %v220
    %v222 = vpop.xlane.xlu0 %221
    %v223 = vadd.f32 %v187, %v188
    %v224 = vadd.f32 %v223, %v189
    %v225 = vadd.f32 %v224, %v190
    %v226 = vadd.f32 %v225, %v191
    %v227 = vadd.f32 %v226, %v192
    %v228 = vsel %vm174, %v195, 0.0
    %v229 = vadd.f32 %v227, %v228
    %230 = vadd.xlane.f32.xlu0 %v229
    %v231 = vpop.xlane.xlu0 %230
    %v232 = vadd.f32 %v196, %v197
    %v233 = vadd.f32 %v232, %v198
    %v234 = vadd.f32 %v233, %v199
    %v235 = vadd.f32 %v234, %v200
    %v236 = vadd.f32 %v235, %v201
    %v237 = vsel %vm174, %v204, 0.0
    %v238 = vadd.f32 %v236, %v237
    %239 = vadd.xlane.f32.xlu0 %v238
    %v240 = vpop.xlane.xlu0 %239
    %v241 = vmul.f32 %v213, 0.0006377551
    %v242 = vmul.f32 %v222, 0.0006377551
    %v243 = vmul.f32 %v231, 0.0006377551
    %v244 = vmul.f32 %v240, 0.0006377551
    %v245 = vsub.f32 %v112, %v241
    %v246 = vsub.f32 %v113, %v241
    %v247 = vsub.f32 %v114, %v241
    %v248 = vsub.f32 %v115, %v241
    %v249 = vsub.f32 %v116, %v241
    %v250 = vsub.f32 %v117, %v241
    %v251 = vsub.f32 %v118, %v241
    %v252 = vsub.f32 %v119, %v242
    %v253 = vsub.f32 %v120, %v242
    %v254 = vsub.f32 %v121, %v242
    %v255 = vsub.f32 %v122, %v242
    %v256 = vsub.f32 %v123, %v242
    %v257 = vsub.f32 %v124, %v242
    %v258 = vsub.f32 %v125, %v242
    %v259 = vsub.f32 %v126, %v243
    %v260 = vsub.f32 %v127, %v243
    %v261 = vsub.f32 %v128, %v243
    %v262 = vsub.f32 %v129, %v243
    %v263 = vsub.f32 %v130, %v243
    %v264 = vsub.f32 %v131, %v243
    %v265 = vsub.f32 %v132, %v243
    %v266 = vsub.f32 %v133, %v244
    %v267 = vsub.f32 %v134, %v244
    %v268 = vsub.f32 %v135, %v244
    %v269 = vsub.f32 %v136, %v244
    %v270 = vsub.f32 %v137, %v244
    %v271 = vsub.f32 %v138, %v244
    %v272 = vsub.f32 %v139, %v244
    %v273 = vsub.f32 %v140, %v241
    %v274 = vsub.f32 %v141, %v241
    %v275 = vsub.f32 %v142, %v241
    %v276 = vsub.f32 %v143, %v241
    %v277 = vsub.f32 %v144, %v241
    %v278 = vsub.f32 %v145, %v241
    %v279 = vsub.f32 %v146, %v241
    %v280 = vsub.f32 %v147, %v242
    %v281 = vsub.f32 %v148, %v242
    %v282 = vsub.f32 %v149, %v242
    %v283 = vsub.f32 %v150, %v242
    %v284 = vsub.f32 %v151, %v242
    %v285 = vsub.f32 %v152, %v242
    %v286 = vsub.f32 %v153, %v242
    %v287 = vsub.f32 %v154, %v243
    %v288 = vsub.f32 %v155, %v243
    %v289 = vsub.f32 %v156, %v243
    %v290 = vsub.f32 %v157, %v243
    %v291 = vsub.f32 %v158, %v243
    %v292 = vsub.f32 %v159, %v243
    %v293 = vsub.f32 %v160, %v243
    %v294 = vsub.f32 %v161, %v244
    %v295 = vsub.f32 %v162, %v244
    %v296 = vsub.f32 %v163, %v244
    %v297 = vsub.f32 %v164, %v244
    %v298 = vsub.f32 %v165, %v244
    %v299 = vsub.f32 %v166, %v244
    %v300 = vsub.f32 %v167, %v244
    %v301 = vmul.f32 %v245, %v245
    %v302 = vmul.f32 %v246, %v246
    %v303 = vmul.f32 %v247, %v247
    %v304 = vmul.f32 %v248, %v248
    %v305 = vmul.f32 %v249, %v249
    %v306 = vmul.f32 %v250, %v250
    %v307 = vmul.f32 %v251, %v251
    %v308 = vmul.f32 %v252, %v252
    %v309 = vmul.f32 %v253, %v253
    %v310 = vmul.f32 %v254, %v254
    %v311 = vmul.f32 %v255, %v255
    %v312 = vmul.f32 %v256, %v256
    %v313 = vmul.f32 %v257, %v257
    %v314 = vmul.f32 %v258, %v258
    %v315 = vmul.f32 %v259, %v259
    %v316 = vmul.f32 %v260, %v260
    %v317 = vmul.f32 %v261, %v261
    %v318 = vmul.f32 %v262, %v262
    %v319 = vmul.f32 %v263, %v263
    %v320 = vmul.f32 %v264, %v264
    %v321 = vmul.f32 %v265, %v265
    %v322 = vmul.f32 %v266, %v266
    %v323 = vmul.f32 %v267, %v267
    %v324 = vmul.f32 %v268, %v268
    %v325 = vmul.f32 %v269, %v269
    %v326 = vmul.f32 %v270, %v270
    %v327 = vmul.f32 %v271, %v271
    %v328 = vmul.f32 %v272, %v272
    %v329 = vmul.f32 %v273, %v273
    %v330 = vmul.f32 %v274, %v274
    %v331 = vmul.f32 %v275, %v275
    %v332 = vmul.f32 %v276, %v276
    %v333 = vmul.f32 %v277, %v277
    %v334 = vmul.f32 %v278, %v278
    %v335 = vmul.f32 %v279, %v279
    %v336 = vmul.f32 %v280, %v280
    %v337 = vmul.f32 %v281, %v281
    %v338 = vmul.f32 %v282, %v282
    %v339 = vmul.f32 %v283, %v283
    %v340 = vmul.f32 %v284, %v284
    %v341 = vmul.f32 %v285, %v285
    %v342 = vmul.f32 %v286, %v286
    %v343 = vmul.f32 %v287, %v287
    %v344 = vmul.f32 %v288, %v288
    %v345 = vmul.f32 %v289, %v289
    %v346 = vmul.f32 %v290, %v290
    %v347 = vmul.f32 %v291, %v291
    %v348 = vmul.f32 %v292, %v292
    %v349 = vmul.f32 %v293, %v293
    %v350 = vmul.f32 %v294, %v294
    %v351 = vmul.f32 %v295, %v295
    %v352 = vmul.f32 %v296, %v296
    %v353 = vmul.f32 %v297, %v297
    %v354 = vmul.f32 %v298, %v298
    %v355 = vmul.f32 %v299, %v299
    %v356 = vmul.f32 %v300, %v300
    %v357 = vadd.f32 %v301, %v329
    %v358 = vadd.f32 %v302, %v330
    %v359 = vadd.f32 %v303, %v331
    %v360 = vadd.f32 %v304, %v332
    %v361 = vadd.f32 %v305, %v333
    %v362 = vadd.f32 %v306, %v334
    %v363 = vsel %vm174, %v307, 0.0
    %v364 = vsel %vm174, %v335, 0.0
    %v365 = vadd.f32 %v363, %v364
    %v366 = vadd.f32 %v308, %v336
    %v367 = vadd.f32 %v309, %v337
    %v368 = vadd.f32 %v310, %v338
    %v369 = vadd.f32 %v311, %v339
    %v370 = vadd.f32 %v312, %v340
    %v371 = vadd.f32 %v313, %v341
    %v372 = vsel %vm174, %v314, 0.0
    %v373 = vsel %vm174, %v342, 0.0
    %v374 = vadd.f32 %v372, %v373
    %v375 = vadd.f32 %v315, %v343
    %v376 = vadd.f32 %v316, %v344
    %v377 = vadd.f32 %v317, %v345
    %v378 = vadd.f32 %v318, %v346
    %v379 = vadd.f32 %v319, %v347
    %v380 = vadd.f32 %v320, %v348
    %v381 = vsel %vm174, %v321, 0.0
    %v382 = vsel %vm174, %v349, 0.0
    %v383 = vadd.f32 %v381, %v382
    %v384 = vadd.f32 %v322, %v350
    %v385 = vadd.f32 %v323, %v351
    %v386 = vadd.f32 %v324, %v352
    %v387 = vadd.f32 %v325, %v353
    %v388 = vadd.f32 %v326, %v354
    %v389 = vadd.f32 %v327, %v355
    %v390 = vsel %vm174, %v328, 0.0
    %v391 = vsel %vm174, %v356, 0.0
    %v392 = vadd.f32 %v390, %v391
    %v393 = vadd.f32 %v357, %v358
    %v394 = vadd.f32 %v393, %v359
    %v395 = vadd.f32 %v394, %v360
    %v396 = vadd.f32 %v395, %v361
    %v397 = vadd.f32 %v396, %v362
    %v398 = vsel %vm174, %v365, 0.0
    %v399 = vadd.f32 %v397, %v398
    %400 = vadd.xlane.f32.xlu0 %v399
    %v401 = vpop.xlane.xlu0 %400
    %v402 = vadd.f32 %v366, %v367
    %v403 = vadd.f32 %v402, %v368
    %v404 = vadd.f32 %v403, %v369
    %v405 = vadd.f32 %v404, %v370
    %v406 = vadd.f32 %v405, %v371
    %v407 = vsel %vm174, %v374, 0.0
    %v408 = vadd.f32 %v406, %v407
    %409 = vadd.xlane.f32.xlu0 %v408
    %v410 = vpop.xlane.xlu0 %409
    %v411 = vadd.f32 %v375, %v376
    %v412 = vadd.f32 %v411, %v377
    %v413 = vadd.f32 %v412, %v378
    %v414 = vadd.f32 %v413, %v379
    %v415 = vadd.f32 %v414, %v380
    %v416 = vsel %vm174, %v383, 0.0
    %v417 = vadd.f32 %v415, %v416
    %418 = vadd.xlane.f32.xlu0 %v417
    %v419 = vpop.xlane.xlu0 %418
    %v420 = vadd.f32 %v384, %v385
    %v421 = vadd.f32 %v420, %v386
    %v422 = vadd.f32 %v421, %v387
    %v423 = vadd.f32 %v422, %v388
    %v424 = vadd.f32 %v423, %v389
    %v425 = vsel %vm174, %v392, 0.0
    %v426 = vadd.f32 %v424, %v425
    %427 = vadd.xlane.f32.xlu0 %v426
    %v428 = vpop.xlane.xlu0 %427
    %v429 = vmul.f32 %v401, 0.0006377551
    %v430 = vmul.f32 %v410, 0.0006377551
    %v431 = vmul.f32 %v419, 0.0006377551
    %v432 = vmul.f32 %v428, 0.0006377551
    %v433 = vadd.f32 %v429, 1e-05
    %v434 = vadd.f32 %v430, 1e-05
    %v435 = vadd.f32 %v431, 1e-05
    %v436 = vadd.f32 %v432, 1e-05
    %v437 = vrsqrt.pop %v433
    %v438 = vrsqrt.pop %v434
    %v439 = vrsqrt.pop %v435
    %v440 = vrsqrt.pop %v436
    %v441 = vld [vmem:[%s1] sm:$0xff]
    %v442 = vld [vmem:[%s1 + $0x8] sm:$0xff]
    %v443 = vld [vmem:[%s1 + $0x10] sm:$0xff]
    %v444 = vld [vmem:[%s1 + $0x18] sm:$0xff]
    %v445 = vmul.f32 %v441, %v437
    %v446 = vmul.f32 %v442, %v438
    %v447 = vmul.f32 %v443, %v439
    %v448 = vmul.f32 %v444, %v440
    %v449 = vld [vmem:[%s2] sm:$0xff]
    %v450 = vld [vmem:[%s2 + $0x8] sm:$0xff]
    %v451 = vld [vmem:[%s2 + $0x10] sm:$0xff]
    %v452 = vld [vmem:[%s2 + $0x18] sm:$0xff]
    %v453 = vmul.f32 %v241, %v445
    %v454 = vmul.f32 %v242, %v446
    %v455 = vmul.f32 %v243, %v447
    %v456 = vmul.f32 %v244, %v448
    %v457 = vsub.f32 %v449, %v453
    %v458 = vsub.f32 %v450, %v454
    %v459 = vsub.f32 %v451, %v455
    %v460 = vsub.f32 %v452, %v456
    %462 = vset.pattern.permute.xlu0 0
    %463 = vperm.xlu0 %462, %v445
    %v464 = vpop.permute.xlu0 %463
    %467 = vset.pattern.permute.xlu0 0
    %468 = vperm.xlu0 %467, %v446
    %v469 = vpop.permute.xlu0 %468
    %472 = vset.pattern.permute.xlu0 0
    %473 = vperm.xlu0 %472, %v447
    %v474 = vpop.permute.xlu0 %473
    %477 = vset.pattern.permute.xlu0 0
    %478 = vperm.xlu0 %477, %v448
    %v479 = vpop.permute.xlu0 %478
    %v481 = vmul.f32 %v112, %v464
    %v482 = vmul.f32 %v113, %v464
    %v483 = vmul.f32 %v114, %v464
    %v484 = vmul.f32 %v115, %v464
    %v485 = vmul.f32 %v116, %v464
    %v486 = vmul.f32 %v117, %v464
    %v487 = vmul.f32 %v118, %v464
    %v488 = vmul.f32 %v119, %v469
    %v489 = vmul.f32 %v120, %v469
    %v490 = vmul.f32 %v121, %v469
    %v491 = vmul.f32 %v122, %v469
    %v492 = vmul.f32 %v123, %v469
    %v493 = vmul.f32 %v124, %v469
    %v494 = vmul.f32 %v125, %v469
    %v495 = vmul.f32 %v126, %v474
    %v496 = vmul.f32 %v127, %v474
    %v497 = vmul.f32 %v128, %v474
    %v498 = vmul.f32 %v129, %v474
    %v499 = vmul.f32 %v130, %v474
    %v500 = vmul.f32 %v131, %v474
    %v501 = vmul.f32 %v132, %v474
    %v502 = vmul.f32 %v133, %v479
    %v503 = vmul.f32 %v134, %v479
    %v504 = vmul.f32 %v135, %v479
    %v505 = vmul.f32 %v136, %v479
    %v506 = vmul.f32 %v137, %v479
    %v507 = vmul.f32 %v138, %v479
    %v508 = vmul.f32 %v139, %v479
    %v509 = vmul.f32 %v140, %v464
    %v510 = vmul.f32 %v141, %v464
    %v511 = vmul.f32 %v142, %v464
    %v512 = vmul.f32 %v143, %v464
    %v513 = vmul.f32 %v144, %v464
    %v514 = vmul.f32 %v145, %v464
    %v515 = vmul.f32 %v146, %v464
    %v516 = vmul.f32 %v147, %v469
    %v517 = vmul.f32 %v148, %v469
    %v518 = vmul.f32 %v149, %v469
    %v519 = vmul.f32 %v150, %v469
    %v520 = vmul.f32 %v151, %v469
    %v521 = vmul.f32 %v152, %v469
    %v522 = vmul.f32 %v153, %v469
    %v523 = vmul.f32 %v154, %v474
    %v524 = vmul.f32 %v155, %v474
    %v525 = vmul.f32 %v156, %v474
    %v526 = vmul.f32 %v157, %v474
    %v527 = vmul.f32 %v158, %v474
    %v528 = vmul.f32 %v159, %v474
    %v529 = vmul.f32 %v160, %v474
    %v530 = vmul.f32 %v161, %v479
    %v531 = vmul.f32 %v162, %v479
    %v532 = vmul.f32 %v163, %v479
    %v533 = vmul.f32 %v164, %v479
    %v534 = vmul.f32 %v165, %v479
    %v535 = vmul.f32 %v166, %v479
    %v536 = vmul.f32 %v167, %v479
    %538 = vset.pattern.permute.xlu0 0
    %539 = vperm.xlu0 %538, %v457
    %v540 = vpop.permute.xlu0 %539
    %543 = vset.pattern.permute.xlu0 0
    %544 = vperm.xlu0 %543, %v458
    %v545 = vpop.permute.xlu0 %544
    %548 = vset.pattern.permute.xlu0 0
    %549 = vperm.xlu0 %548, %v459
    %v550 = vpop.permute.xlu0 %549
    %553 = vset.pattern.permute.xlu0 0
    %554 = vperm.xlu0 %553, %v460
    %v555 = vpop.permute.xlu0 %554
    %v557 = vadd.f32 %v481, %v540
    %v558 = vadd.f32 %v482, %v540
    %v559 = vadd.f32 %v483, %v540
    %v560 = vadd.f32 %v484, %v540
    %v561 = vadd.f32 %v485, %v540
    %v562 = vadd.f32 %v486, %v540
    %v563 = vadd.f32 %v487, %v540
    %v564 = vadd.f32 %v488, %v545
    %v565 = vadd.f32 %v489, %v545
    %v566 = vadd.f32 %v490, %v545
    %v567 = vadd.f32 %v491, %v545
    %v568 = vadd.f32 %v492, %v545
    %v569 = vadd.f32 %v493, %v545
    %v570 = vadd.f32 %v494, %v545
    %v571 = vadd.f32 %v495, %v550
    %v572 = vadd.f32 %v496, %v550
    %v573 = vadd.f32 %v497, %v550
    %v574 = vadd.f32 %v498, %v550
    %v575 = vadd.f32 %v499, %v550
    %v576 = vadd.f32 %v500, %v550
    %v577 = vadd.f32 %v501, %v550
    %v578 = vadd.f32 %v502, %v555
    %v579 = vadd.f32 %v503, %v555
    %v580 = vadd.f32 %v504, %v555
    %v581 = vadd.f32 %v505, %v555
    %v582 = vadd.f32 %v506, %v555
    %v583 = vadd.f32 %v507, %v555
    %v584 = vadd.f32 %v508, %v555
    %v585 = vadd.f32 %v509, %v540
    %v586 = vadd.f32 %v510, %v540
    %v587 = vadd.f32 %v511, %v540
    %v588 = vadd.f32 %v512, %v540
    %v589 = vadd.f32 %v513, %v540
    %v590 = vadd.f32 %v514, %v540
    %v591 = vadd.f32 %v515, %v540
    %v592 = vadd.f32 %v516, %v545
    %v593 = vadd.f32 %v517, %v545
    %v594 = vadd.f32 %v518, %v545
    %v595 = vadd.f32 %v519, %v545
    %v596 = vadd.f32 %v520, %v545
    %v597 = vadd.f32 %v521, %v545
    %v598 = vadd.f32 %v522, %v545
    %v599 = vadd.f32 %v523, %v550
    %v600 = vadd.f32 %v524, %v550
    %v601 = vadd.f32 %v525, %v550
    %v602 = vadd.f32 %v526, %v550
    %v603 = vadd.f32 %v527, %v550
    %v604 = vadd.f32 %v528, %v550
    %v605 = vadd.f32 %v529, %v550
    %v606 = vadd.f32 %v530, %v555
    %v607 = vadd.f32 %v531, %v555
    %v608 = vadd.f32 %v532, %v555
    %v609 = vadd.f32 %v533, %v555
    %v610 = vadd.f32 %v534, %v555
    %v611 = vadd.f32 %v535, %v555
    %v612 = vadd.f32 %v536, %v555
    %613 = vst [vmem:[#allocation5] sm:$0xff] %v557
    %614 = vst [vmem:[#allocation5 + $0x8] sm:$0xff] %v558
    %615 = vst [vmem:[#allocation5 + $0x10] sm:$0xff] %v559
    %616 = vst [vmem:[#allocation5 + $0x18] sm:$0xff] %v560
    %617 = vst [vmem:[#allocation5 + $0x20] sm:$0xff] %v561
    %618 = vst [vmem:[#allocation5 + $0x28] sm:$0xff] %v562
    %619 = vst.msk [vmem:[#allocation5 + $0x30] sm:$0xff] %vm174, %v563
    %620 = vst [vmem:[#allocation5 + $0x38] sm:$0xff] %v564
    %621 = vst [vmem:[#allocation5 + $0x40] sm:$0xff] %v565
    %622 = vst [vmem:[#allocation5 + $0x48] sm:$0xff] %v566
    %623 = vst [vmem:[#allocation5 + $0x50] sm:$0xff] %v567
    %624 = vst [vmem:[#allocation5 + $0x58] sm:$0xff] %v568
    %625 = vst [vmem:[#allocation5 + $0x60] sm:$0xff] %v569
    %626 = vst.msk [vmem:[#allocation5 + $0x68] sm:$0xff] %vm174, %v570
    %627 = vst [vmem:[#allocation5 + $0x70] sm:$0xff] %v571
    %628 = vst [vmem:[#allocation5 + $0x78] sm:$0xff] %v572
    %629 = vst [vmem:[#allocation5 + $0x80] sm:$0xff] %v573
    %630 = vst [vmem:[#allocation5 + $0x88] sm:$0xff] %v574
    %631 = vst [vmem:[#allocation5 + $0x90] sm:$0xff] %v575
    %632 = vst [vmem:[#allocation5 + $0x98] sm:$0xff] %v576
    %633 = vst.msk [vmem:[#allocation5 + $0xa0] sm:$0xff] %vm174, %v577
    %634 = vst [vmem:[#allocation5 + $0xa8] sm:$0xff] %v578
    %635 = vst [vmem:[#allocation5 + $0xb0] sm:$0xff] %v579
    %636 = vst [vmem:[#allocation5 + $0xb8] sm:$0xff] %v580
    %637 = vst [vmem:[#allocation5 + $0xc0] sm:$0xff] %v581
    %638 = vst [vmem:[#allocation5 + $0xc8] sm:$0xff] %v582
    %639 = vst [vmem:[#allocation5 + $0xd0] sm:$0xff] %v583
    %640 = vst.msk [vmem:[#allocation5 + $0xd8] sm:$0xff] %vm174, %v584
    %641 = vst [vmem:[#allocation5 + $0xe0] sm:$0xff] %v585
    %642 = vst [vmem:[#allocation5 + $0xe8] sm:$0xff] %v586
    %643 = vst [vmem:[#allocation5 + $0xf0] sm:$0xff] %v587
    %644 = vst [vmem:[#allocation5 + $0xf8] sm:$0xff] %v588
    %645 = vst [vmem:[#allocation5 + $0x100] sm:$0xff] %v589
    %646 = vst [vmem:[#allocation5 + $0x108] sm:$0xff] %v590
    %647 = vst.msk [vmem:[#allocation5 + $0x110] sm:$0xff] %vm174, %v591
    %648 = vst [vmem:[#allocation5 + $0x118] sm:$0xff] %v592
    %649 = vst [vmem:[#allocation5 + $0x120] sm:$0xff] %v593
    %650 = vst [vmem:[#allocation5 + $0x128] sm:$0xff] %v594
    %651 = vst [vmem:[#allocation5 + $0x130] sm:$0xff] %v595
    %652 = vst [vmem:[#allocation5 + $0x138] sm:$0xff] %v596
    %653 = vst [vmem:[#allocation5 + $0x140] sm:$0xff] %v597
    %654 = vst.msk [vmem:[#allocation5 + $0x148] sm:$0xff] %vm174, %v598
    %655 = vst [vmem:[#allocation5 + $0x150] sm:$0xff] %v599
    %656 = vst [vmem:[#allocation5 + $0x158] sm:$0xff] %v600
    %657 = vst [vmem:[#allocation5 + $0x160] sm:$0xff] %v601
    %658 = vst [vmem:[#allocation5 + $0x168] sm:$0xff] %v602
    %659 = vst [vmem:[#allocation5 + $0x170] sm:$0xff] %v603
    %660 = vst [vmem:[#allocation5 + $0x178] sm:$0xff] %v604
    %661 = vst.msk [vmem:[#allocation5 + $0x180] sm:$0xff] %vm174, %v605
    %662 = vst [vmem:[#allocation5 + $0x188] sm:$0xff] %v606
    %663 = vst [vmem:[#allocation5 + $0x190] sm:$0xff] %v607
    %664 = vst [vmem:[#allocation5 + $0x198] sm:$0xff] %v608
    %665 = vst [vmem:[#allocation5 + $0x1a0] sm:$0xff] %v609
    %666 = vst [vmem:[#allocation5 + $0x1a8] sm:$0xff] %v610
    %667 = vst [vmem:[#allocation5 + $0x1b0] sm:$0xff] %v611
    %668 = vst.msk [vmem:[#allocation5 + $0x1b8] sm:$0xff] %vm174, %v612
    // Predicated region
    $region22: #{tpu_custom_call.1} parent=1 // pred_check
      _
    $region23: #{tpu_custom_call.1} parent=1 // pred_check_branch
      %670 = sbr.rel (0) target = $region25
    $region24: #{tpu_custom_call.1} parent=1 // pred_region
      %s672 = ssub.s32 7168, 7168
      %673 = vsyncadd [#allocation4], %s672
      %s674 = sshll.u32 [#allocation5], 4
      %s675 = int_to_ptr.vmem [resolvable:$true] %s674
      %680 = dma.vmem_to_hbm [thread:$0]  %s675, 7168, %s4, [#allocation4], 896, 896, 56
    $region25: #{tpu_custom_call.1} parent=1 // pred_fallthru
      _
    // Predicated region
    $region26: #{tpu_custom_call.1} parent=1 // pred_check
      _
    $region27: #{tpu_custom_call.1} parent=1 // pred_check_branch
      %682 = sbr.rel (0) target = $region29
    $region28: #{tpu_custom_call.1} parent=1 // pred_region
      %683 = dma.done [#allocation4], 7168
    $region29: #{tpu_custom_call.1} parent=1 // pred_fallthru
      _
    %684 = vsyncpa [#allocation3], 1
    %685 = vsyncpa [#allocation4], 1

</llo_original>
